<compile_context>
chip_gen: v7x
topology: tpu7x:2x2x1
jax: 0.10.0
libtpu: 0.0.40
codegen_flags: <defaults>
</compile_context>

<pallas_src>
import functools

import jax
import jax.numpy as jnp
from jax.experimental import pallas as pl
from jax.experimental.pallas import tpu as pltpu


def _round_up(x, m):
    return ((x + m - 1) // m) * m


def _cdiv(a, b):
    return (a + b - 1) // b


def focal_loss_kernel(logits_ref, targets_ref, out_ref, acc_ref, *, gamma, n_valid):
    o = pl.program_id(0)                  # outer (core-parallel) axis
    i = pl.program_id(1)                  # inner reduction axis over row tiles
    num_inner = pl.num_programs(1)

    @pl.when(i == 0)
    def _():
        acc_ref[...] = jnp.zeros_like(acc_ref)

    logits = logits_ref[...].astype(jnp.float32)           # (TN, C)
    tgt = targets_ref[...]                                  # (TN, 1) int32
    tn, c = logits.shape

    # Target logit via masked select; (1, C) iota broadcasts against (TN, 1) targets,
    # so no (TN, C) int32 temporary is materialized.
    col_ids = jax.lax.broadcasted_iota(jnp.int32, (1, c), 1)
    tgt_logit = jnp.sum(jnp.where(col_ids == tgt, logits, 0.0),
                        axis=-1, keepdims=True)             # (TN, 1)

    # Numerically-stable log-sum-exp cross-entropy.
    m = jnp.max(logits, axis=-1, keepdims=True)             # (TN, 1)
    lse = m + jnp.log(jnp.sum(jnp.exp(logits - m), axis=-1, keepdims=True))
    ce = jnp.maximum(lse - tgt_logit, 0.0)                  # clamp ULP negatives
    pt = jnp.exp(-ce)
    focal = (1.0 - pt) ** gamma * ce                        # alpha applied in wrapper

    # Mask rows beyond the true batch (partial / clamped trailing blocks).
    # Must stay a select: garbage rows may hold NaN/Inf through lse/ce.
    base = (o * num_inner + i) * tn
    row_ids = base + jax.lax.broadcasted_iota(jnp.int32, (tn, 1), 0)
    focal = jnp.where(row_ids < n_valid, focal, 0.0)

    # Per-step cross-sublane reduce (XLU, hidden under the logits DMA) into a scalar acc.
    acc_ref[...] += jnp.sum(focal, axis=0, keepdims=True)   # (1, 1)

    @pl.when(i == num_inner - 1)
    def _():
        out_ref[...] = jnp.broadcast_to(jnp.sum(acc_ref[...]), out_ref.shape)


def focal_loss(logits, targets, *, alpha=0.25, gamma=2, tile_n=None, num_outer=None,
               vmem_budget_bytes=None):
    """Pallas FocalLoss. logits: (N, C) float; targets: (N,) int class ids.

    NOTE: out-of-range / negative target ids are not special-cased (the reference
    module has no ignore_index either).
    """
    n, c = logits.shape

    # Keep gamma integer when possible so (1-pt)**gamma is plain multiplies.
    g = float(gamma)
    gamma_static = int(g) if g.is_integer() else g

    # ---- Chip-generation defaults -------------------------------------------
    kind = ""
    try:
        kind = jax.devices()[0].device_kind.lower()
    except Exception:  # pragma: no cover - detection is best-effort only
        pass
    is_v7 = "v7" in kind

    if num_outer is None:
        num_outer = 2 if is_v7 else 1          # 2 TensorCores only on v7x
    num_outer = max(1, int(num_outer))

    if vmem_budget_bytes is None:
        # v7x has 64 MiB physical VMEM (vs 128 on v5e/v6e): budget the working set lower.
        vmem_budget_bytes = (24 if is_v7 else 32) * 1024 * 1024

    # ---- Tile selection against the VMEM working-set model ------------------
    # Per row (bytes): logits f32 block x2 (double-buffered) + ~2 (tn,C) f32 temps
    #                  + lane-padded (tn,1) targets block x2 + ~3 live (tn,1) row stats.
    per_row_bytes = 4 * c * 4 + 5 * 512
    if tile_n is None:
        tile_n = vmem_budget_bytes // per_row_bytes
        tile_n = min(tile_n, 8192)   # bound lane-sparse row temps / strided targets DMA
    tile_n = max(8, (int(tile_n) // 8) * 8)

    rows_per_core = _round_up(max(1, _cdiv(n, num_outer)), 8)
    tile_n = min(tile_n, rows_per_core)
    num_inner = _cdiv(rows_per_core, tile_n)
    n_cover = num_outer * num_inner * tile_n

    # Logits are NOT padded.  Blocks that would start past the end of the array are
    # clamped onto the last valid block; their rows are masked in-kernel.
    max_blk = (n - 1) // tile_n
    logits_block = lambda o, i: (jnp.minimum(o * num_inner + i, max_blk), 0)
    targets_block = lambda o, i: (o * num_inner + i, 0)

    # Only the (tiny) targets array is padded so its blocks are always in range.
    pad = n_cover - n
    targets_p = jnp.pad(targets.astype(jnp.int32), ((0, pad),)).reshape(n_cover, 1)

    # Derive the scoped-VMEM limit from the chosen tile (+50% headroom), clamped per chip.
    ws_est = per_row_bytes * tile_n + (1 << 16)
    limit_cap = (48 if is_v7 else 96) * 1024 * 1024
    vmem_limit = int(min(max(32 * 1024 * 1024, (ws_est * 3) // 2), limit_cap))

    kernel = functools.partial(focal_loss_kernel, gamma=gamma_static, n_valid=n)

    partials = pl.pallas_call(
        kernel,
        out_shape=jax.ShapeDtypeStruct((num_outer, 8, 128), jnp.float32),
        grid_spec=pltpu.PrefetchScalarGridSpec(
            num_scalar_prefetch=0,
            grid=(num_outer, num_inner),
            in_specs=[
                pl.BlockSpec((tile_n, c), logits_block),   # big streaming logits tile
                pl.BlockSpec((tile_n, 1), targets_block),  # per-row int targets
            ],
            # One lane-dense partial-sum tile per outer (core) block.
            out_specs=pl.BlockSpec((1, 8, 128), lambda o, i: (o, 0, 0)),
            scratch_shapes=[pltpu.VMEM((1, 1), jnp.float32)],
        ),
        compiler_params=pltpu.CompilerParams(
            dimension_semantics=("parallel", "arbitrary"),
            vmem_limit_bytes=vmem_limit,
        ),
    )(logits, targets_p)

    # Final reduction over per-core partials; alpha and the mean (true N) applied here.
    return alpha * partials[:, 0, 0].sum() / n


def focal_loss_ref(logits, targets, alpha=0.25, gamma=2):
    """Pure-JAX reference matching torch semantics."""
    logp = jax.nn.log_softmax(logits.astype(jnp.float32), axis=-1)
    ce = -jnp.take_along_axis(logp, targets[:, None].astype(jnp.int32), axis=-1)[:, 0]
    pt = jnp.exp(-ce)
    return jnp.mean(alpha * (1.0 - pt) ** gamma * ce)


if __name__ == "__main__":
    # FocalLoss(alpha=0.25, gamma=2) has no learned parameters.
    alpha, gamma = 0.25, 2

    key = jax.random.PRNGKey(0)
    k1, k2, k3, k4 = jax.random.split(key, 4)

    # 1) Small, deliberately tile-misaligned batch: exercises the unpadded partial block.
    N1, C1 = 22, 128
    logits1 = jax.random.normal(k1, (N1, C1), dtype=jnp.float32)
    targets1 = jax.random.randint(k2, (N1,), 0, C1, dtype=jnp.int32)
    out1 = jax.block_until_ready(focal_loss(logits1, targets1, alpha=alpha, gamma=gamma))
    ref1 = focal_loss_ref(logits1, targets1, alpha=alpha, gamma=gamma)
    assert jnp.allclose(out1, ref1, rtol=1e-4, atol=1e-6), (out1, ref1)

    # 2) Multi-step grid + forced 2-way outer split + clamped trailing (fully-OOB) block.
    N2, C2 = 300, 128
    logits2 = jax.random.normal(k3, (N2, C2), dtype=jnp.float32)
    targets2 = jax.random.randint(k4, (N2,), 0, C2, dtype=jnp.int32)
    out2 = jax.block_until_ready(
        focal_loss(logits2, targets2, alpha=alpha, gamma=gamma, tile_n=64, num_outer=2))
    ref2 = focal_loss_ref(logits2, targets2, alpha=alpha, gamma=gamma)
    assert jnp.allclose(out2, ref2, rtol=1e-4, atol=1e-6), (out2, ref2)

    print("KERNEL_OK")
</pallas_src>

<mosaic_0001>
module attributes {stable_mosaic.version = 11 : i64} {
  func.func @focal_loss_kernel(%arg0: i32, %arg1: i32, %arg2: memref<24x128xf32, #tpu.memory_space<vmem>>, %arg3: memref<24x1xi32, #tpu.memory_space<vmem>>, %arg4: memref<1x8x128xf32, #tpu.memory_space<vmem>>, %arg5: memref<1x1xf32, #tpu.memory_space<vmem>>) attributes {dimension_semantics = [#tpu.dimension_semantics<parallel>, #tpu.dimension_semantics<arbitrary>], iteration_bounds = array<i64: 1, 1>, scalar_prefetch = 0 : i64, scratch_operands = 1 : i64, tpu.core_type = #tpu.core_type<tc>, window_params = [{transform_indices = @transform_0, window_bounds = array<i64: 24, 128>}, {transform_indices = @transform_1, window_bounds = array<i64: 24, 1>}, {transform_indices = @transform_2, window_bounds = array<i64: 1, 8, 128>}]} {
    %c0_i32 = arith.constant 0 : i32
    %0 = arith.cmpi eq, %arg1, %c0_i32 : i32
    %1 = arith.extui %0 : i1 to i32
    %c0_i32_0 = arith.constant 0 : i32
    %2 = arith.cmpi ne, %1, %c0_i32_0 : i32
    scf.if %2 {
      %cst_18 = arith.constant 0.000000e+00 : f32
      %50 = vector.broadcast %cst_18 : f32 to vector<1x1xf32>
      %c0_19 = arith.constant 0 : index
      %c0_20 = arith.constant 0 : index
      %51 = vector.load %arg5[%c0_19, %c0_20] : memref<1x1xf32, #tpu.memory_space<vmem>>, vector<1x1xf32>
      tpu.vector_store %arg5[%c0_19, %c0_20], %50 {strides = array<i32>} : memref<1x1xf32, #tpu.memory_space<vmem>>, vector<1x1xf32>,
    } else {
    }
    %c0 = arith.constant 0 : index
    %c0_1 = arith.constant 0 : index
    %3 = vector.load %arg2[%c0, %c0_1] : memref<24x128xf32, #tpu.memory_space<vmem>>, vector<24x128xf32>
    %c0_2 = arith.constant 0 : index
    %c0_3 = arith.constant 0 : index
    %4 = vector.load %arg3[%c0_2, %c0_3] : memref<24x1xi32, #tpu.memory_space<vmem>>, vector<24x1xi32>
    %5 = tpu.iota {dimensions = array<i32: 1>} : vector<1x128xi32>
    %6 = vector.broadcast %5 : vector<1x128xi32> to vector<24x128xi32>
    %7 = vector.broadcast %4 : vector<24x1xi32> to vector<24x128xi32>
    %8 = arith.cmpi eq, %6, %7 : vector<24x128xi32>
    %cst = arith.constant 0.000000e+00 : f32
    %9 = vector.broadcast %cst : f32 to vector<24x128xf32>
    %10 = arith.select %8, %3, %9 : vector<24x128xi1>, vector<24x128xf32>
    %cst_4 = arith.constant dense<0.000000e+00> : vector<24xf32>
    %11 = vector.multi_reduction <add>, %10, %cst_4 [1] : vector<24x128xf32> to vector<24xf32>
    %12 = vector.shape_cast %11 : vector<24xf32> to vector<24x1xf32>
    %cst_5 = arith.constant dense<0xFF800000> : vector<24xf32>
    %13 = vector.multi_reduction <maximumf>, %3, %cst_5 [1] : vector<24x128xf32> to vector<24xf32>
    %14 = vector.shape_cast %13 : vector<24xf32> to vector<24x1xf32>
    %15 = vector.broadcast %14 : vector<24x1xf32> to vector<24x128xf32>
    %16 = arith.subf %3, %15 : vector<24x128xf32>
    %17 = math.exp %16 : vector<24x128xf32>
    %cst_6 = arith.constant dense<0.000000e+00> : vector<24xf32>
    %18 = vector.multi_reduction <add>, %17, %cst_6 [1] : vector<24x128xf32> to vector<24xf32>
    %19 = vector.shape_cast %18 : vector<24xf32> to vector<24x1xf32>
    %20 = math.log %19 : vector<24x1xf32>
    %21 = arith.addf %14, %20 : vector<24x1xf32>
    %22 = arith.subf %21, %12 : vector<24x1xf32>
    %cst_7 = arith.constant 0.000000e+00 : f32
    %23 = vector.broadcast %cst_7 : f32 to vector<24x1xf32>
    %24 = arith.maximumf %22, %23 : vector<24x1xf32>
    %cst_8 = arith.constant 0.000000e+00 : f32
    %25 = vector.broadcast %cst_8 : f32 to vector<24x1xf32>
    %26 = arith.subf %25, %24 : vector<24x1xf32>
    %27 = math.exp %26 : vector<24x1xf32>
    %cst_9 = arith.constant 1.000000e+00 : f32
    %28 = vector.broadcast %cst_9 : f32 to vector<24x1xf32>
    %29 = arith.subf %28, %27 : vector<24x1xf32>
    %30 = arith.mulf %29, %29 : vector<24x1xf32>
    %31 = arith.mulf %30, %24 : vector<24x1xf32>
    %c1_i32 = arith.constant 1 : i32
    %32 = arith.muli %arg0, %c1_i32 : i32
    %33 = arith.addi %32, %arg1 : i32
    %c24_i32 = arith.constant 24 : i32
    %34 = arith.muli %33, %c24_i32 : i32
    %35 = tpu.iota {dimensions = array<i32: 0>} : vector<24x1xi32>
    %36 = vector.broadcast %34 : i32 to vector<24x1xi32>
    %37 = arith.addi %36, %35 : vector<24x1xi32>
    %c22_i32 = arith.constant 22 : i32
    %38 = vector.broadcast %c22_i32 : i32 to vector<24x1xi32>
    %39 = arith.cmpi slt, %37, %38 : vector<24x1xi32>
    %cst_10 = arith.constant 0.000000e+00 : f32
    %40 = vector.broadcast %cst_10 : f32 to vector<24x1xf32>
    %41 = arith.select %39, %31, %40 : vector<24x1xi1>, vector<24x1xf32>
    %c0_11 = arith.constant 0 : index
    %c0_12 = arith.constant 0 : index
    %42 = vector.load %arg5[%c0_11, %c0_12] : memref<1x1xf32, #tpu.memory_space<vmem>>, vector<1x1xf32>
    %cst_13 = arith.constant dense<0.000000e+00> : vector<1xf32>
    %43 = vector.multi_reduction <add>, %41, %cst_13 [0] : vector<24x1xf32> to vector<1xf32>
    %44 = vector.shape_cast %43 : vector<1xf32> to vector<1x1xf32>
    %45 = arith.addf %42, %44 : vector<1x1xf32>
    %c0_14 = arith.constant 0 : index
    %c0_15 = arith.constant 0 : index
    %46 = vector.load %arg5[%c0_14, %c0_15] : memref<1x1xf32, #tpu.memory_space<vmem>>, vector<1x1xf32>
    tpu.vector_store %arg5[%c0_14, %c0_15], %45 {strides = array<i32>} : memref<1x1xf32, #tpu.memory_space<vmem>>, vector<1x1xf32>,
    %c0_i32_16 = arith.constant 0 : i32
    %47 = arith.cmpi eq, %arg1, %c0_i32_16 : i32
    %48 = arith.extui %47 : i1 to i32
    %c0_i32_17 = arith.constant 0 : i32
    %49 = arith.cmpi ne, %48, %c0_i32_17 : i32
    scf.if %49 {
      %c0_18 = arith.constant 0 : index
      %c0_19 = arith.constant 0 : index
      %50 = vector.load %arg5[%c0_18, %c0_19] : memref<1x1xf32, #tpu.memory_space<vmem>>, vector<1x1xf32>
      %51 = vector.shape_cast %50 : vector<1x1xf32> to vector<1x1x1xf32>
      %cst_20 = arith.constant dense<0.000000e+00> : vector<1xf32>
      %52 = vector.multi_reduction <add>, %51, %cst_20 [1, 2] : vector<1x1x1xf32> to vector<1xf32>
      %53 = vector.shape_cast %52 : vector<1xf32> to vector<1x1x1xf32>
      %54 = vector.extract %53[0, 0, 0] : f32 from vector<1x1x1xf32>
      %55 = vector.broadcast %54 : f32 to vector<1x8x128xf32>
      %c0_21 = arith.constant 0 : index
      %c0_22 = arith.constant 0 : index
      %c0_23 = arith.constant 0 : index
      %56 = vector.load %arg4[%c0_21, %c0_22, %c0_23] : memref<1x8x128xf32, #tpu.memory_space<vmem>>, vector<1x8x128xf32>
      tpu.vector_store %arg4[%c0_21, %c0_22, %c0_23], %55 {strides = array<i32>} : memref<1x8x128xf32, #tpu.memory_space<vmem>>, vector<1x8x128xf32>,
    } else {
    }
    return
  }
  func.func @transform_0(%arg0: i32, %arg1: i32) -> (i32, i32) {
    %c1_i32 = arith.constant 1 : i32
    %0 = arith.muli %arg0, %c1_i32 : i32
    %1 = arith.addi %0, %arg1 : i32
    %c0_i32 = arith.constant 0 : i32
    %2 = arith.minsi %1, %c0_i32 : i32
    %c0_i32_0 = arith.constant 0 : i32
    %c0_i32_1 = arith.constant 0 : i32
    return %2, %c0_i32_0 : i32, i32
  }
  func.func @transform_1(%arg0: i32, %arg1: i32) -> (i32, i32) {
    %c1_i32 = arith.constant 1 : i32
    %0 = arith.muli %arg0, %c1_i32 : i32
    %1 = arith.addi %0, %arg1 : i32
    %c0_i32 = arith.constant 0 : i32
    %c0_i32_0 = arith.constant 0 : i32
    return %1, %c0_i32 : i32, i32
  }
  func.func @transform_2(%arg0: i32, %arg1: i32) -> (i32, i32, i32) {
    %c0_i32 = arith.constant 0 : i32
    %c0_i32_0 = arith.constant 0 : i32
    %c0_i32_1 = arith.constant 0 : i32
    return %arg0, %c0_i32, %c0_i32_0 : i32, i32, i32
  }
}

</mosaic_0001>

<llo_original>
// kernel: tpu_custom_call.1
$region0: #{tpu_custom_call.1}
  #allocation0 [shape = 'u32[]', space=smem, size = 0x4, offset = 0x4, fixed_abs, tag = 'smem constant byte address 0x4 - core index']
  #allocation1 [shape = 'u32[144,128]{1,0:T(1,128)}', space=vmem, size = 0x12000, scoped, tag = 'internal scratch']
  #allocation2 [shape = 'f32[1,1]{1,0:T(1,128)}', space=vmem, size = 0x200, scoped, tag = 'scratch operand']
  %s0 = inlined_call_operand.vmem [shape: f32[22,128], index: 0, kind: input, shape index: {}]
  %s1 = inlined_call_operand.vmem [shape: s32[24,1], index: 1, kind: input, shape index: {}]
  %s2 = inlined_call_operand.hbm [shape: f32[1,8,128], index: 2, kind: output, shape index: {}]
  %s3 = sld [smem:[#allocation0]]
  $region26: #{tpu_custom_call.1} parent=0
    _
  %s5 = ssub.s32 1, %s3
  %s6 = scalar_select 0, %s5, %s3
  $region1: #{tpu_custom_call.1} parent=0
    #allocation3 [shape = 'u8[4096]{0}', space=vmem, size = 0x1000, scoped, tag = 'output window, operand 0, single buffered']
    #allocation4 [shape = 's32[1]{0}', space=sflag, size = 0x4, scoped, tag = 'scoped memory for tpu_custom_call.1']
    %7 = vsyncpa [#allocation4], 0
    // Predicated region
    $region2: #{tpu_custom_call.1} parent=1 // pred_check
      _
    $region3: #{tpu_custom_call.1} parent=1 // pred_check_branch
      %9 = sbr.rel (0) target = $region5
    $region4: #{tpu_custom_call.1} parent=1 // pred_region
      %s10 = sadd.s32 0, 0
      %p11 = scmp.lt.s32.totalorder %s10, 0
      %s12 = scalar_select %p11, %s10, 0
      %s13 = smul.u32 3, %s12
      %p14 = scmp.lt.s32.totalorder %s13, 2
      %s15 = scalar_select %p14, %s13, 2
      %s16 = smul.addr %s15, 8
      %s17 = scalar_lea.vmem %s0, %s16
      %s18 = sadd.s32 0, 0
      %p19 = scmp.lt.s32.totalorder %s18, 0
      %s20 = scalar_select %p19, %s18, 0
      %s21 = smul.u32 3, %s20
    $region5: #{tpu_custom_call.1} parent=1 // pred_fallthru
      _
    // Predicated region
    $region6: #{tpu_custom_call.1} parent=1 // pred_check
      _
    $region7: #{tpu_custom_call.1} parent=1 // pred_check_branch
      %23 = sbr.rel (0) target = $region9
    $region8: #{tpu_custom_call.1} parent=1 // pred_region
      %s24 = sadd.s32 0, 0
      %s25 = smul.u32 3, %s24
      %p26 = scmp.lt.s32.totalorder %s25, 2
      %s27 = scalar_select %p26, %s25, 2
      %s28 = smul.addr %s27, 8
      %s29 = scalar_lea.vmem %s1, %s28
      %s30 = sadd.s32 0, 0
      %s31 = smul.u32 3, %s30
    $region9: #{tpu_custom_call.1} parent=1 // pred_fallthru
      _
    %s32 = sadd.s32 0, 0
    %p33 = scmp.lt.s32.totalorder %s32, 0
    %s34 = scalar_select %p33, %s32, 0
    %s35 = smul.u32 3, %s34
    %p36 = scmp.lt.s32.totalorder %s35, 2
    %s37 = scalar_select %p36, %s35, 2
    %s38 = smul.addr %s37, 8
    %s39 = scalar_lea.vmem %s0, %s38
    %s40 = sadd.s32 0, 0
    %s41 = smul.u32 3, %s40
    %p42 = scmp.lt.s32.totalorder %s41, 2
    %s43 = scalar_select %p42, %s41, 2
    %s44 = smul.addr %s43, 8
    %s45 = scalar_lea.vmem %s1, %s44
    %s46 = sadd.s32 0, 0
    %p47 = scmp.lt.s32.totalorder %s46, 0
    %s48 = scalar_select %p47, %s46, 0
    %s49 = smul.u32 3, %s48
    %p50 = scmp.lt.s32.totalorder %s49, 2
    %s51 = scalar_select %p50, %s49, 2
    %s52 = smul.addr %s51, 8
    %s53 = scalar_lea.vmem %s0, %s52
    %s54 = sadd.s32 0, 0
    %p55 = scmp.lt.s32.totalorder %s54, 0
    %s56 = scalar_select %p55, %s54, 0
    %s57 = smul.u32 3, %s56
    %s58 = sadd.s32 0, 0
    %s59 = smul.u32 3, %s58
    %p60 = scmp.lt.s32.totalorder %s59, 2
    %s61 = scalar_select %p60, %s59, 2
    %s62 = smul.addr %s61, 8
    %s63 = scalar_lea.vmem %s1, %s62
    %s64 = sadd.s32 0, 0
    %s65 = smul.u32 3, %s64
    %p66 = scmp.eq.s32.totalorder 0, 0
    // Predicated region
    $region10: #{tpu_custom_call.1} parent=1 // pred_check
      %p67 = pneg %p66
    $region11: #{tpu_custom_call.1} parent=1 // pred_check_branch
      %69 = sbr.rel (%p67) target = $region13
    $region12: #{tpu_custom_call.1} parent=1 // pred_region
      %vm70 = vcmask 0
      %71 = vst.msk [vmem:[#allocation2] sm:$0x1] %vm70, 0.0
    $region13: #{tpu_custom_call.1} parent=1 // pred_fallthru
      _
    %v72 = vld [vmem:[%s53] sm:$0xff]
    %v73 = vld [vmem:[%s53 + $0x8] sm:$0xff]
    %v74 = vld [vmem:[%s53 + $0x10] sm:$0xff]
    %v75 = vld [vmem:[%s63] sm:$0xff]
    %v76 = vld [vmem:[%s63 + $0x8] sm:$0xff]
    %v77 = vld [vmem:[%s63 + $0x10] sm:$0xff]
    %v78 = vlaneseq
    %v79 = vand.u32 %v78, 127
    %80 = vset.pattern.permute.xlu0 0
    %81 = vperm.xlu0 %80, %v75
    %v82 = vpop.permute.xlu0 %81
    %83 = vset.pattern.permute.xlu0 0
    %84 = vperm.xlu0 %83, %v76
    %v85 = vpop.permute.xlu0 %84
    %86 = vset.pattern.permute.xlu0 0
    %87 = vperm.xlu0 %86, %v77
    %v88 = vpop.permute.xlu0 %87
    %vm89 = vcmp.eq.s32.totalorder %v79, %v82
    %vm90 = vcmp.eq.s32.totalorder %v79, %v85
    %vm91 = vcmp.eq.s32.totalorder %v79, %v88
    %v92 = vsel %vm89, %v72, 0.0
    %v93 = vsel %vm90, %v73, 0.0
    %v94 = vsel %vm91, %v74, 0.0
    %95 = vadd.xlane.f32.xlu0 %v92
    %v96 = vpop.xlane.xlu0 %95
    %97 = vadd.xlane.f32.xlu0 %v93
    %v98 = vpop.xlane.xlu0 %97
    %99 = vadd.xlane.f32.xlu0 %v94
    %v100 = vpop.xlane.xlu0 %99
    %101 = vmax.xlane.f32.xlu0 %v72
    %v102 = vpop.xlane.xlu0 %101
    %103 = vmax.xlane.f32.xlu0 %v73
    %v104 = vpop.xlane.xlu0 %103
    %105 = vmax.xlane.f32.xlu0 %v74
    %v106 = vpop.xlane.xlu0 %105
    %v107 = vsub.f32 %v72, %v102
    %v108 = vsub.f32 %v73, %v104
    %v109 = vsub.f32 %v74, %v106
    %v110 = vmul.f32 %v107, 1.442695
    %v111 = vpow.pop %v110
    %v112 = vmul.f32 %v108, 1.442695
    %v113 = vpow.pop %v112
    %v114 = vmul.f32 %v109, 1.442695
    %v115 = vpow.pop %v114
    %116 = vadd.xlane.f32.xlu0 %v111
    %v117 = vpop.xlane.xlu0 %116
    %118 = vadd.xlane.f32.xlu0 %v113
    %v119 = vpop.xlane.xlu0 %118
    %120 = vadd.xlane.f32.xlu0 %v115
    %v121 = vpop.xlane.xlu0 %120
    %v122 = vlog2.pop %v117
    %v123 = vmul.f32 %v122, 0.6931472
    %v124 = vlog2.pop %v119
    %v125 = vmul.f32 %v124, 0.6931472
    %v126 = vlog2.pop %v121
    %v127 = vmul.f32 %v126, 0.6931472
    %v128 = vadd.f32 %v102, %v123
    %v129 = vadd.f32 %v104, %v125
    %v130 = vadd.f32 %v106, %v127
    %v131 = vsub.f32 %v128, %v96
    %v132 = vsub.f32 %v129, %v98
    %v133 = vsub.f32 %v130, %v100
    %v134 = vmax.f32 %v131, 0.0
    %v135 = vmax.f32 %v132, 0.0
    %v136 = vmax.f32 %v133, 0.0
    %v137 = vsub.f32 0.0, %v134
    %v138 = vsub.f32 0.0, %v135
    %v139 = vsub.f32 0.0, %v136
    %v140 = vmul.f32 %v137, 1.442695
    %v141 = vpow.pop %v140
    %v142 = vmul.f32 %v138, 1.442695
    %v143 = vpow.pop %v142
    %v144 = vmul.f32 %v139, 1.442695
    %v145 = vpow.pop %v144
    %v146 = vsub.f32 1.0, %v141
    %v147 = vsub.f32 1.0, %v143
    %v148 = vsub.f32 1.0, %v145
    %v149 = vmul.f32 %v146, %v146
    %v150 = vmul.f32 %v147, %v147
    %v151 = vmul.f32 %v148, %v148
    %v152 = vmul.f32 %v149, %v134
    %v153 = vmul.f32 %v150, %v135
    %v154 = vmul.f32 %v151, %v136
    %s155 = sadd.s32 0, 0
    %s156 = smul.u32 %s155, 24
    %v157 = vlaneseq
    %v158 = vshrl.u32 %v157, 7
    %v159 = vadd.s32 %v158, 8
    %v160 = vadd.s32 %v158, 16
    %v161 = vstv %s156
    %v162 = vadd.s32 %v161, %v158
    %v163 = vadd.s32 %v161, %v159
    %v164 = vadd.s32 %v161, %v160
    %vm165 = vcmp.lt.s32.totalorder %v162, 22
    %vm166 = vcmp.lt.s32.totalorder %v163, 22
    %vm167 = vcmp.lt.s32.totalorder %v164, 22
    %v168 = vsel %vm165, %v152, 0.0
    %v169 = vsel %vm166, %v153, 0.0
    %v170 = vsel %vm167, %v154, 0.0
    %v171 = vld [vmem:[#allocation2] sm:$0x1]
    %v172 = vadd.f32 %v168, %v169
    %v173 = vadd.f32 %v172, %v170
    %v174 = vrot.slane %v173, 4
    %v175 = vadd.f32 %v173, %v174
    %v176 = vrot.slane %v175, 2
    %v177 = vadd.f32 %v175, %v176
    %v178 = vrot.slane %v177, 1
    %v179 = vadd.f32 %v177, %v178
    %v180 = vadd.f32 %v171, %v179
    %vm181 = vcmask 0
    %182 = vst.msk [vmem:[#allocation2] sm:$0x1] %vm181, %v180
    // Predicated region
    $region14: #{tpu_custom_call.1} parent=1 // pred_check
      %p183 = pneg %p66
    $region15: #{tpu_custom_call.1} parent=1 // pred_check_branch
      %185 = sbr.rel (%p183) target = $region17
    $region16: #{tpu_custom_call.1} parent=1 // pred_region
      %v186 = vld [vmem:[#allocation2] sm:$0x1]
      %v187 = vadd.f32 %v186, 0.0
      %s188 = vtos %v187
      %v189 = vstv %s188
      %190 = vst [vmem:[#allocation3] sm:$0xff] %v189
    $region17: #{tpu_custom_call.1} parent=1 // pred_fallthru
      _
    // Predicated region
    $region18: #{tpu_custom_call.1} parent=1 // pred_check
      _
    $region19: #{tpu_custom_call.1} parent=1 // pred_check_branch
      %192 = sbr.rel (0) target = $region21
    $region20: #{tpu_custom_call.1} parent=1 // pred_region
      %s194 = ssub.s32 128, 128
      %195 = vsyncadd [#allocation4], %s194
      %s197 = sshll.u32 [#allocation3], 4
      %s198 = int_to_ptr.vmem [resolvable:$true] %s197
      %200 = dma.vmem_to_hbm [thread:$0]  %s198, 128, %s2, [#allocation4]
    $region21: #{tpu_custom_call.1} parent=1 // pred_fallthru
      _
    // Predicated region
    $region22: #{tpu_custom_call.1} parent=1 // pred_check
      _
    $region23: #{tpu_custom_call.1} parent=1 // pred_check_branch
      %202 = sbr.rel (0) target = $region25
    $region24: #{tpu_custom_call.1} parent=1 // pred_region
      %203 = dma.done [#allocation4], 128
    $region25: #{tpu_custom_call.1} parent=1 // pred_fallthru
      _
    %204 = vsyncpa [#allocation4], 1

</llo_original>
